<compile_context>
chip_gen: v6e
topology: v6e:2x2x1
jax: 0.10.0
libtpu: 0.0.40
codegen_flags: <defaults>
</compile_context>

<pallas_src>
import functools

import jax
import jax.numpy as jnp
from jax.experimental import pallas as pl
from jax.experimental.pallas import tpu as pltpu  # noqa: F401  (TPU backend)


# ----------------------------- Pallas kernel -------------------------------

def bow_kernel(idx_ref, pos_ref, att_ref, wte_ref, wfc_ref, bfc_ref,
               wproj_ref, bproj_ref, wlm_ref, blm_ref, out_ref):
    N = idx_ref.shape[0]          # B*T rows
    Vp = wte_ref.shape[0]         # lane-dense padded vocab

    # --- Token embedding as a one-hot MXU matmul (fused gather).
    lane_ids = jax.lax.broadcasted_iota(jnp.int32, (N, Vp), 1)
    onehot = (lane_ids == idx_ref[...]).astype(jnp.float32)      # (N, Vp)
    x = (jnp.dot(onehot, wte_ref[...], preferred_element_type=jnp.float32)
         + pos_ref[...])                                          # (N, C)

    # --- CausalBoW: softmax over a zero-score causal mask == uniform average
    #     over positions j <= t.  att_ref is the precomputed block-diagonal
    #     (B*T, B*T) averaging matrix, so this is one MXU matmul + residual.
    x = x + jnp.dot(att_ref[...], x, preferred_element_type=jnp.float32)

    # --- MLP: c_proj(tanh(c_fc(x))), residual.
    h = jnp.tanh(
        jnp.dot(x, wfc_ref[...], preferred_element_type=jnp.float32)
        + bfc_ref[...]
    )
    x = x + (jnp.dot(h, wproj_ref[...], preferred_element_type=jnp.float32)
             + bproj_ref[...])

    # --- lm_head (vocab padded to a multiple of 128 lanes -> unmasked stores).
    out_ref[...] = (jnp.dot(x, wlm_ref[...], preferred_element_type=jnp.float32)
                    + blm_ref[...])


# ------------------------------ JAX wrapper ---------------------------------

def _round_up(x, m):
    return ((x + m - 1) // m) * m


@jax.jit
def bow_forward(idx, params):
    """idx: int32 [B, T] token indices.  Returns logits [B, T, vocab]."""
    B, T = idx.shape
    wte, wpe = params["wte"], params["wpe"]
    V, C = wte.shape
    H = params["w_fc"].shape[1]
    Vp = _round_up(V, 128)        # lane-dense padded vocab
    N = B * T

    # Token indices as a (N, 1) column for the in-kernel one-hot compare.
    idx_col = idx.reshape(N, 1).astype(jnp.int32)

    # Positional embeddings broadcast to every batch row (constant tiling).
    pos_flat = jnp.tile(wpe[:T].astype(jnp.float32), (B, 1))      # (N, C)

    # Exact softmax of a zero-score causal mask: row t = 1/(t+1) on j <= t.
    att = (jnp.tril(jnp.ones((T, T), jnp.float32))
           / jnp.arange(1, T + 1, dtype=jnp.float32)[:, None])
    # Block-diagonal over the batch so one 2-D matmul handles all of B.
    att_bd = jnp.kron(jnp.eye(B, dtype=jnp.float32), att)         # (N, N)

    # Pad vocab dim to lane-dense width (zeros in padded rows / columns).
    wte_p = jnp.pad(wte.astype(jnp.float32), ((0, Vp - V), (0, 0)))   # (Vp, C)
    w_lm_p = jnp.pad(params["w_lm"], ((0, 0), (0, Vp - V)))           # (C, Vp)
    b_lm_p = jnp.pad(params["b_lm"], ((0, 0), (0, Vp - V)))           # (1, Vp)

    cost = pl.CostEstimate(
        flops=2 * N * (Vp * C + N * C + C * H + H * C + C * Vp),
        transcendentals=N * H,
        bytes_accessed=4 * (N + N * C + N * N + Vp * C
                            + C * H + H + H * C + C + C * Vp + Vp
                            + N * Vp),
    )

    # Single kernel invocation: every operand fits comfortably in VMEM at this
    # size, so no grid / no pipelining overhead.
    logits_p = pl.pallas_call(
        bow_kernel,
        out_shape=jax.ShapeDtypeStruct((N, Vp), jnp.float32),
        cost_estimate=cost,
    )(idx_col, pos_flat, att_bd, wte_p,
      params["w_fc"], params["b_fc"],
      params["w_proj"], params["b_proj"],
      w_lm_p, b_lm_p)

    return logits_p[:, :V].reshape(B, T, V)


# ------------------------- deterministic init + test ------------------------

def init_params(key, vocab_size, block_size, n_embd, n_embd2):
    ks = jax.random.split(key, 7)
    s = 0.02
    return {
        "wte":    s * jax.random.normal(ks[0], (vocab_size, n_embd), jnp.float32),
        "wpe":    s * jax.random.normal(ks[1], (block_size, n_embd), jnp.float32),
        # Linear weights pre-transposed to [in, out]; biases kept 2D (1, out).
        "w_fc":   s * jax.random.normal(ks[2], (n_embd, n_embd2), jnp.float32),
        "b_fc":   s * jax.random.normal(ks[3], (1, n_embd2), jnp.float32),
        "w_proj": s * jax.random.normal(ks[4], (n_embd2, n_embd), jnp.float32),
        "b_proj": s * jax.random.normal(ks[5], (1, n_embd), jnp.float32),
        "w_lm":   s * jax.random.normal(ks[6], (n_embd, vocab_size), jnp.float32),
        "b_lm":   jnp.zeros((1, vocab_size), jnp.float32),
    }


def bow_forward_ref(idx, params):
    """Pure-JAX reference (mirrors the PyTorch forward)."""
    B, T = idx.shape
    x = jnp.take(params["wte"], idx, axis=0) + params["wpe"][None, :T]
    tril = jnp.tril(jnp.ones((T, T)))
    att = jnp.where(tril == 0, -jnp.inf, 0.0)
    att = jax.nn.softmax(att, axis=-1)
    x = x + jnp.einsum("tj,bjc->btc", att, x)
    h = jnp.tanh(x @ params["w_fc"] + params["b_fc"])
    x = x + (h @ params["w_proj"] + params["b_proj"])
    return x @ params["w_lm"] + params["b_lm"]


if __name__ == "__main__":
    # Small config consistent with the module: block_size=8, vocab=48,
    # n_embd=32, n_embd2=64, batch=2, seq len t = block_size.
    vocab_size, block_size, n_embd, n_embd2 = 48, 8, 32, 64
    B, T = 2, 8

    key = jax.random.PRNGKey(0)
    kp, ki = jax.random.split(key)
    params = init_params(kp, vocab_size, block_size, n_embd, n_embd2)
    idx = jax.random.randint(ki, (B, T), 0, vocab_size, dtype=jnp.int32)

    logits = bow_forward(idx, params)
    logits = jax.block_until_ready(logits)

    ref = bow_forward_ref(idx, params)
    assert logits.shape == (B, T, vocab_size)
    assert jnp.allclose(logits, ref, atol=1e-5, rtol=1e-5), (
        float(jnp.max(jnp.abs(logits - ref))))

    # TODO(synk): cross_entropy loss branch (targets is not None) is left to
    # plain JAX callers; kernel implements the logits path only.
    print("KERNEL_OK")
</pallas_src>

<mosaic_0001>
module attributes {stable_mosaic.version = 11 : i64} {
  func.func @bow_kernel(%arg0: memref<16x1xi32, #tpu.memory_space<vmem>>, %arg1: memref<16x32xf32, #tpu.memory_space<vmem>>, %arg2: memref<16x16xf32, #tpu.memory_space<vmem>>, %arg3: memref<128x32xf32, #tpu.memory_space<vmem>>, %arg4: memref<32x64xf32, #tpu.memory_space<vmem>>, %arg5: memref<1x64xf32, #tpu.memory_space<vmem>>, %arg6: memref<64x32xf32, #tpu.memory_space<vmem>>, %arg7: memref<1x32xf32, #tpu.memory_space<vmem>>, %arg8: memref<32x128xf32, #tpu.memory_space<vmem>>, %arg9: memref<1x128xf32, #tpu.memory_space<vmem>>, %arg10: memref<16x128xf32, #tpu.memory_space<vmem>>) attributes {dimension_semantics = [], scalar_prefetch = 0 : i64, scratch_operands = 0 : i64, tpu.core_type = #tpu.core_type<tc>} {
    %0 = tpu.iota {dimensions = array<i32: 1>} : vector<16x128xi32>
    %c0 = arith.constant 0 : index
    %c0_0 = arith.constant 0 : index
    %1 = vector.load %arg0[%c0, %c0_0] : memref<16x1xi32, #tpu.memory_space<vmem>>, vector<16x1xi32>
    %2 = vector.broadcast %1 : vector<16x1xi32> to vector<16x128xi32>
    %3 = arith.cmpi eq, %0, %2 : vector<16x128xi32>
    %4 = arith.extui %3 : vector<16x128xi1> to vector<16x128xi32>
    %5 = arith.sitofp %4 : vector<16x128xi32> to vector<16x128xf32>
    %c0_1 = arith.constant 0 : index
    %c0_2 = arith.constant 0 : index
    %6 = vector.load %arg3[%c0_1, %c0_2] : memref<128x32xf32, #tpu.memory_space<vmem>>, vector<128x32xf32>
    %cst = arith.constant dense<0.000000e+00> : vector<16x32xf32>
    %7 = tpu.matmul %5, %6, %cst {dimension_numbers = #tpu.dot_dimension_numbers<[1], [0], [0], [1], [0, 0, 1, 1], [], []>} : vector<16x128xf32>, vector<128x32xf32>, vector<16x32xf32> -> vector<16x32xf32>
    %c0_3 = arith.constant 0 : index
    %c0_4 = arith.constant 0 : index
    %8 = vector.load %arg1[%c0_3, %c0_4] : memref<16x32xf32, #tpu.memory_space<vmem>>, vector<16x32xf32>
    %9 = arith.addf %7, %8 : vector<16x32xf32>
    %c0_5 = arith.constant 0 : index
    %c0_6 = arith.constant 0 : index
    %10 = vector.load %arg2[%c0_5, %c0_6] : memref<16x16xf32, #tpu.memory_space<vmem>>, vector<16x16xf32>
    %cst_7 = arith.constant dense<0.000000e+00> : vector<16x32xf32>
    %11 = tpu.matmul %10, %9, %cst_7 {dimension_numbers = #tpu.dot_dimension_numbers<[1], [0], [0], [1], [0, 0, 1, 1], [], []>} : vector<16x16xf32>, vector<16x32xf32>, vector<16x32xf32> -> vector<16x32xf32>
    %12 = arith.addf %9, %11 : vector<16x32xf32>
    %c0_8 = arith.constant 0 : index
    %c0_9 = arith.constant 0 : index
    %13 = vector.load %arg4[%c0_8, %c0_9] : memref<32x64xf32, #tpu.memory_space<vmem>>, vector<32x64xf32>
    %cst_10 = arith.constant dense<0.000000e+00> : vector<16x64xf32>
    %14 = tpu.matmul %12, %13, %cst_10 {dimension_numbers = #tpu.dot_dimension_numbers<[1], [0], [0], [1], [0, 0, 1, 1], [], []>} : vector<16x32xf32>, vector<32x64xf32>, vector<16x64xf32> -> vector<16x64xf32>
    %c0_11 = arith.constant 0 : index
    %c0_12 = arith.constant 0 : index
    %15 = vector.load %arg5[%c0_11, %c0_12] : memref<1x64xf32, #tpu.memory_space<vmem>>, vector<1x64xf32>
    %16 = vector.broadcast %15 : vector<1x64xf32> to vector<16x64xf32>
    %17 = arith.addf %14, %16 : vector<16x64xf32>
    %18 = math.tanh %17 : vector<16x64xf32>
    %c0_13 = arith.constant 0 : index
    %c0_14 = arith.constant 0 : index
    %19 = vector.load %arg6[%c0_13, %c0_14] : memref<64x32xf32, #tpu.memory_space<vmem>>, vector<64x32xf32>
    %cst_15 = arith.constant dense<0.000000e+00> : vector<16x32xf32>
    %20 = tpu.matmul %18, %19, %cst_15 {dimension_numbers = #tpu.dot_dimension_numbers<[1], [0], [0], [1], [0, 0, 1, 1], [], []>} : vector<16x64xf32>, vector<64x32xf32>, vector<16x32xf32> -> vector<16x32xf32>
    %c0_16 = arith.constant 0 : index
    %c0_17 = arith.constant 0 : index
    %21 = vector.load %arg7[%c0_16, %c0_17] : memref<1x32xf32, #tpu.memory_space<vmem>>, vector<1x32xf32>
    %22 = vector.broadcast %21 : vector<1x32xf32> to vector<16x32xf32>
    %23 = arith.addf %20, %22 : vector<16x32xf32>
    %24 = arith.addf %12, %23 : vector<16x32xf32>
    %c0_18 = arith.constant 0 : index
    %c0_19 = arith.constant 0 : index
    %25 = vector.load %arg8[%c0_18, %c0_19] : memref<32x128xf32, #tpu.memory_space<vmem>>, vector<32x128xf32>
    %cst_20 = arith.constant dense<0.000000e+00> : vector<16x128xf32>
    %26 = tpu.matmul %24, %25, %cst_20 {dimension_numbers = #tpu.dot_dimension_numbers<[1], [0], [0], [1], [0, 0, 1, 1], [], []>} : vector<16x32xf32>, vector<32x128xf32>, vector<16x128xf32> -> vector<16x128xf32>
    %c0_21 = arith.constant 0 : index
    %c0_22 = arith.constant 0 : index
    %27 = vector.load %arg9[%c0_21, %c0_22] : memref<1x128xf32, #tpu.memory_space<vmem>>, vector<1x128xf32>
    %28 = vector.broadcast %27 : vector<1x128xf32> to vector<16x128xf32>
    %29 = arith.addf %26, %28 : vector<16x128xf32>
    %c0_23 = arith.constant 0 : index
    %c0_24 = arith.constant 0 : index
    %30 = vector.load %arg10[%c0_23, %c0_24] : memref<16x128xf32, #tpu.memory_space<vmem>>, vector<16x128xf32>
    tpu.vector_store %arg10[%c0_23, %c0_24], %29 {strides = array<i32>} : memref<16x128xf32, #tpu.memory_space<vmem>>, vector<16x128xf32>,
    return
  }
}

</mosaic_0001>

<llo_original>
// kernel: bow_forward.1
$region0: #{bow_forward.1}
  #allocation0 [shape = 'u32[]', space=smem, size = 0x4, offset = 0x4, fixed_abs, tag = 'smem constant byte address 0x4 - core index']
  #allocation1 [shape = 'u32[144,128]{1,0:T(1,128)}', space=vmem, size = 0x12000, scoped, tag = 'internal scratch']
  %s0 = inlined_call_operand.vmem [shape: s32[16,1], index: 0, kind: input, shape index: {}]
  %s1 = inlined_call_operand.vmem [shape: f32[16,32], index: 1, kind: input, shape index: {}]
  %s2 = inlined_call_operand.vmem [shape: f32[16,16], index: 2, kind: input, shape index: {}]
  %s3 = inlined_call_operand.vmem [shape: f32[128,32], index: 3, kind: input, shape index: {}]
  %s4 = inlined_call_operand.vmem [shape: f32[32,64], index: 4, kind: input, shape index: {}]
  %s5 = inlined_call_operand.vmem [shape: f32[1,64], index: 5, kind: input, shape index: {}]
  %s6 = inlined_call_operand.vmem [shape: f32[64,32], index: 6, kind: input, shape index: {}]
  %s7 = inlined_call_operand.vmem [shape: f32[1,32], index: 7, kind: input, shape index: {}]
  %s8 = inlined_call_operand.vmem [shape: f32[32,128], index: 8, kind: input, shape index: {}]
  %s9 = inlined_call_operand.vmem [shape: f32[1,128], index: 9, kind: input, shape index: {}]
  %s10 = inlined_call_operand.vmem [shape: f32[16,128], index: 10, kind: output, shape index: {}]
  %s11 = sld [smem:[#allocation0]]
  $region50: #{bow_forward.1} parent=0
    _
  %s13 = ssub.s32 1, %s11
  %s14 = scalar_select 0, %s13, %s11
  // Predicated region
  $region2: #{bow_forward.1} parent=0 // pred_check
    _
  $region3: #{bow_forward.1} parent=0 // pred_check_branch
    %16 = sbr.rel (0) target = $region5
  $region4: #{bow_forward.1} parent=0 // pred_region
    _
  $region5: #{bow_forward.1} parent=0 // pred_fallthru
    _
  // Predicated region
  $region6: #{bow_forward.1} parent=0 // pred_check
    _
  $region7: #{bow_forward.1} parent=0 // pred_check_branch
    %18 = sbr.rel (0) target = $region9
  $region8: #{bow_forward.1} parent=0 // pred_region
    _
  $region9: #{bow_forward.1} parent=0 // pred_fallthru
    _
  // Predicated region
  $region10: #{bow_forward.1} parent=0 // pred_check
    _
  $region11: #{bow_forward.1} parent=0 // pred_check_branch
    %20 = sbr.rel (0) target = $region13
  $region12: #{bow_forward.1} parent=0 // pred_region
    _
  $region13: #{bow_forward.1} parent=0 // pred_fallthru
    _
  // Predicated region
  $region14: #{bow_forward.1} parent=0 // pred_check
    _
  $region15: #{bow_forward.1} parent=0 // pred_check_branch
    %22 = sbr.rel (0) target = $region17
  $region16: #{bow_forward.1} parent=0 // pred_region
    _
  $region17: #{bow_forward.1} parent=0 // pred_fallthru
    _
  // Predicated region
  $region18: #{bow_forward.1} parent=0 // pred_check
    _
  $region19: #{bow_forward.1} parent=0 // pred_check_branch
    %24 = sbr.rel (0) target = $region21
  $region20: #{bow_forward.1} parent=0 // pred_region
    _
  $region21: #{bow_forward.1} parent=0 // pred_fallthru
    _
  // Predicated region
  $region22: #{bow_forward.1} parent=0 // pred_check
    _
  $region23: #{bow_forward.1} parent=0 // pred_check_branch
    %26 = sbr.rel (0) target = $region25
  $region24: #{bow_forward.1} parent=0 // pred_region
    _
  $region25: #{bow_forward.1} parent=0 // pred_fallthru
    _
  // Predicated region
  $region26: #{bow_forward.1} parent=0 // pred_check
    _
  $region27: #{bow_forward.1} parent=0 // pred_check_branch
    %28 = sbr.rel (0) target = $region29
  $region28: #{bow_forward.1} parent=0 // pred_region
    _
  $region29: #{bow_forward.1} parent=0 // pred_fallthru
    _
  // Predicated region
  $region30: #{bow_forward.1} parent=0 // pred_check
    _
  $region31: #{bow_forward.1} parent=0 // pred_check_branch
    %30 = sbr.rel (0) target = $region33
  $region32: #{bow_forward.1} parent=0 // pred_region
    _
  $region33: #{bow_forward.1} parent=0 // pred_fallthru
    _
  // Predicated region
  $region34: #{bow_forward.1} parent=0 // pred_check
    _
  $region35: #{bow_forward.1} parent=0 // pred_check_branch
    %32 = sbr.rel (0) target = $region37
  $region36: #{bow_forward.1} parent=0 // pred_region
    _
  $region37: #{bow_forward.1} parent=0 // pred_fallthru
    _
  // Predicated region
  $region38: #{bow_forward.1} parent=0 // pred_check
    _
  $region39: #{bow_forward.1} parent=0 // pred_check_branch
    %34 = sbr.rel (0) target = $region41
  $region40: #{bow_forward.1} parent=0 // pred_region
    _
  $region41: #{bow_forward.1} parent=0 // pred_fallthru
    _
  %v35 = vlaneseq
  %v36 = vand.u32 %v35, 127
  %v37 = vld [vmem:[%s0] sm:$0xff]
  %v38 = vld [vmem:[%s0 + $0x8] sm:$0xff]
  %39 = vset.pattern.permute.xlu0 0
  %40 = vperm.xlu0 %39, %v37
  %v41 = vpop.permute.xlu0 %40
  %42 = vset.pattern.permute.xlu0 0
  %43 = vperm.xlu0 %42, %v38
  %v44 = vpop.permute.xlu0 %43
  %vm45 = vcmp.eq.s32.totalorder %v36, %v41
  %vm46 = vcmp.eq.s32.totalorder %v36, %v44
  %v47 = vsel %vm45, 1, 0
  %v48 = vsel %vm46, 1, 0
  %v49 = vcvt.s32.f32 %v47
  %v50 = vcvt.s32.f32 %v48
  %v51 = vld [vmem:[%s3] sm:$0xff]
  %v52 = vld [vmem:[%s3 + $0x8] sm:$0xff]
  %v53 = vld [vmem:[%s3 + $0x10] sm:$0xff]
  %v54 = vld [vmem:[%s3 + $0x18] sm:$0xff]
  %v55 = vld [vmem:[%s3 + $0x20] sm:$0xff]
  %v56 = vld [vmem:[%s3 + $0x28] sm:$0xff]
  %v57 = vld [vmem:[%s3 + $0x30] sm:$0xff]
  %v58 = vld [vmem:[%s3 + $0x38] sm:$0xff]
  %v59 = vld [vmem:[%s3 + $0x40] sm:$0xff]
  %v60 = vld [vmem:[%s3 + $0x48] sm:$0xff]
  %v61 = vld [vmem:[%s3 + $0x50] sm:$0xff]
  %v62 = vld [vmem:[%s3 + $0x58] sm:$0xff]
  %v63 = vld [vmem:[%s3 + $0x60] sm:$0xff]
  %v64 = vld [vmem:[%s3 + $0x68] sm:$0xff]
  %v65 = vld [vmem:[%s3 + $0x70] sm:$0xff]
  %v66 = vld [vmem:[%s3 + $0x78] sm:$0xff]
  %v67 = vld [vmem:[%s1] sm:$0xff]
  %v68 = vld [vmem:[%s1 + $0x8] sm:$0xff]
  %69 = vmatprep.subr.mxu0 0.0
  %70 = vmatpush1.msra.mxu0 %v66
  %71 = vmatprep.subr.mxu0 0.0
  %72 = vmatpush1.msra.mxu0 %v65
  %73 = vmatprep.subr.mxu0 0.0
  %74 = vmatpush1.msra.mxu0 %v64
  %75 = vmatprep.subr.mxu0 0.0
  %76 = vmatpush1.msra.mxu0 %v63
  %77 = vmatprep.subr.mxu0 0.0
  %78 = vmatpush1.msra.mxu0 %v62
  %79 = vmatprep.subr.mxu0 0.0
  %80 = vmatpush1.msra.mxu0 %v61
  %81 = vmatprep.subr.mxu0 0.0
  %82 = vmatpush1.msra.mxu0 %v60
  %83 = vmatprep.subr.mxu0 0.0
  %84 = vmatpush1.msra.mxu0 %v59
  %85 = vmatprep.subr.mxu0 0.0
  %86 = vmatpush1.msra.mxu0 %v58
  %87 = vmatprep.subr.mxu0 0.0
  %88 = vmatpush1.msra.mxu0 %v57
  %89 = vmatprep.subr.mxu0 0.0
  %90 = vmatpush1.msra.mxu0 %v56
  %91 = vmatprep.subr.mxu0 0.0
  %92 = vmatpush1.msra.mxu0 %v55
  %93 = vmatprep.subr.mxu0 0.0
  %94 = vmatpush1.msra.mxu0 %v54
  %95 = vmatprep.subr.mxu0 0.0
  %96 = vmatpush1.msra.mxu0 %v53
  %97 = vmatprep.subr.mxu0 0.0
  %98 = vmatpush1.msra.mxu0 %v52
  %99 = vmatprep.subr.mxu0 0.0
  %100 = vmatpush1.msra.mxu0 %v51
  %101 = vmatprep.subr.mxu0 0.0
  %102 = vmatpush2.msra.mxu0 0.0
  %103 = vmatprep.subr.mxu0 0.0
  %104 = vmatpush2.msra.mxu0 0.0
  %105 = vmatprep.subr.mxu0 0.0
  %106 = vmatpush2.msra.mxu0 0.0
  %107 = vmatprep.subr.mxu0 0.0
  %108 = vmatpush2.msra.mxu0 0.0
  %109 = vmatprep.subr.mxu0 0.0
  %110 = vmatpush2.msra.mxu0 0.0
  %111 = vmatprep.subr.mxu0 0.0
  %112 = vmatpush2.msra.mxu0 0.0
  %113 = vmatprep.subr.mxu0 0.0
  %114 = vmatpush2.msra.mxu0 0.0
  %115 = vmatprep.subr.mxu0 0.0
  %116 = vmatpush2.msra.mxu0 0.0
  %117 = vmatprep.subr.mxu0 0.0
  %118 = vmatpush2.msra.mxu0 0.0
  %119 = vmatprep.subr.mxu0 0.0
  %120 = vmatpush2.msra.mxu0 0.0
  %121 = vmatprep.subr.mxu0 0.0
  %122 = vmatpush2.msra.mxu0 0.0
  %123 = vmatprep.subr.mxu0 0.0
  %124 = vmatpush2.msra.mxu0 0.0
  %125 = vmatprep.subr.mxu0 0.0
  %126 = vmatpush2.msra.mxu0 0.0
  %127 = vmatprep.subr.mxu0 0.0
  %128 = vmatpush2.msra.mxu0 0.0
  %129 = vmatprep.subr.mxu0 0.0
  %130 = vmatpush2.msra.mxu0 0.0
  %131 = vmatprep.subr.mxu0 0.0
  %132 = vmatpush2.msra.mxu0 0.0
  %133 = vmatprep.mubr.f32.mxu0 0.0
  %134 = vmatmul.mubr.f32.gmra.mxu0 %v49
  %v135 = vpop.f32.mrf.mxu0
  %v136 = vadd.f32 %v67, %v135
  %v137 = vpop.f32.mrf.mxu0
  %138 = vmatprep.mubr.f32.mxu0 0.0
  %139 = vmatmul.mubr.f32.gmra.mxu0 %v50
  %v140 = vpop.f32.mrf.mxu0
  %v141 = vadd.f32 %v68, %v140
  %v142 = vpop.f32.mrf.mxu0
  %143 = vdwg.mxu0
  %v144 = vld [vmem:[%s2] sm:$0xff]
  %v145 = vld [vmem:[%s2 + $0x8] sm:$0xff]
  %vm146 = vcmask 130048
  %v148 = vsel %vm146, %v144, 0
  %v151 = vsel %vm146, %v145, 0
  %153 = vmatprep.subr.mxu0 0.0
  %154 = vmatpush1.msra.mxu0 0.0
  %155 = vmatprep.subr.mxu0 0.0
  %156 = vmatpush1.msra.mxu0 0.0
  %157 = vmatprep.subr.mxu0 0.0
  %158 = vmatpush1.msra.mxu0 0.0
  %159 = vmatprep.subr.mxu0 0.0
  %160 = vmatpush1.msra.mxu0 0.0
  %161 = vmatprep.subr.mxu0 0.0
  %162 = vmatpush1.msra.mxu0 0.0
  %163 = vmatprep.subr.mxu0 0.0
  %164 = vmatpush1.msra.mxu0 0.0
  %165 = vmatprep.subr.mxu0 0.0
  %166 = vmatpush1.msra.mxu0 0.0
  %167 = vmatprep.subr.mxu0 0.0
  %168 = vmatpush1.msra.mxu0 0.0
  %169 = vmatprep.subr.mxu0 0.0
  %170 = vmatpush1.msra.mxu0 0.0
  %171 = vmatprep.subr.mxu0 0.0
  %172 = vmatpush1.msra.mxu0 0.0
  %173 = vmatprep.subr.mxu0 0.0
  %174 = vmatpush1.msra.mxu0 0.0
  %175 = vmatprep.subr.mxu0 0.0
  %176 = vmatpush1.msra.mxu0 0.0
  %177 = vmatprep.subr.mxu0 0.0
  %178 = vmatpush1.msra.mxu0 0.0
  %179 = vmatprep.subr.mxu0 0.0
  %180 = vmatpush1.msra.mxu0 0.0
  %181 = vmatprep.subr.mxu0 0.0
  %182 = vmatpush1.msra.mxu0 %v141
  %183 = vmatprep.subr.mxu0 0.0
  %184 = vmatpush1.msra.mxu0 %v136
  %185 = vmatprep.subr.mxu0 0.0
  %186 = vmatpush2.msra.mxu0 0.0
  %187 = vmatprep.subr.mxu0 0.0
  %188 = vmatpush2.msra.mxu0 0.0
  %189 = vmatprep.subr.mxu0 0.0
  %190 = vmatpush2.msra.mxu0 0.0
  %191 = vmatprep.subr.mxu0 0.0
  %192 = vmatpush2.msra.mxu0 0.0
  %193 = vmatprep.subr.mxu0 0.0
  %194 = vmatpush2.msra.mxu0 0.0
  %195 = vmatprep.subr.mxu0 0.0
  %196 = vmatpush2.msra.mxu0 0.0
  %197 = vmatprep.subr.mxu0 0.0
  %198 = vmatpush2.msra.mxu0 0.0
  %199 = vmatprep.subr.mxu0 0.0
  %200 = vmatpush2.msra.mxu0 0.0
  %201 = vmatprep.subr.mxu0 0.0
  %202 = vmatpush2.msra.mxu0 0.0
  %203 = vmatprep.subr.mxu0 0.0
  %204 = vmatpush2.msra.mxu0 0.0
  %205 = vmatprep.subr.mxu0 0.0
  %206 = vmatpush2.msra.mxu0 0.0
  %207 = vmatprep.subr.mxu0 0.0
  %208 = vmatpush2.msra.mxu0 0.0
  %209 = vmatprep.subr.mxu0 0.0
  %210 = vmatpush2.msra.mxu0 0.0
  %211 = vmatprep.subr.mxu0 0.0
  %212 = vmatpush2.msra.mxu0 0.0
  %213 = vmatprep.subr.mxu0 0.0
  %214 = vmatpush2.msra.mxu0 0.0
  %215 = vmatprep.subr.mxu0 0.0
  %216 = vmatpush2.msra.mxu0 0.0
  %217 = vmatprep.mubr.f32.mxu0 0.0
  %218 = vmatmul.mubr.f32.gmra.mxu0 %v148
  %v219 = vpop.f32.mrf.mxu0
  %v220 = vadd.f32 0.0, %v219
  %v221 = vpop.f32.mrf.mxu0
  %222 = vmatprep.mubr.f32.mxu0 0.0
  %223 = vmatmul.mubr.f32.gmra.mxu0 %v151
  %v224 = vpop.f32.mrf.mxu0
  %v225 = vadd.f32 0.0, %v224
  %v226 = vpop.f32.mrf.mxu0
  %227 = vdwg.mxu0
  %v228 = vadd.f32 %v136, %v220
  %v229 = vadd.f32 %v141, %v225
  %v230 = vld [vmem:[%s4] sm:$0xff]
  %v231 = vld [vmem:[%s4 + $0x8] sm:$0xff]
  %v232 = vld [vmem:[%s4 + $0x10] sm:$0xff]
  %v233 = vld [vmem:[%s4 + $0x18] sm:$0xff]
  %v234 = vld [vmem:[%s5] sm:$0x1]
  %v236 = vlaneseq
  %v237 = vshrl.u32 %v236, 7
  %v238 = vsub.s32 0, %v237
  %v239 = vrot.slane %v234, %v238
  %vm241 = vcmask 261120
  %v243 = vsel %vm241, %v228, 0
  %v246 = vsel %vm241, %v229, 0
  %248 = vmatprep.subr.mxu0 0.0
  %249 = vmatpush1.msra.mxu0 0.0
  %250 = vmatprep.subr.mxu0 0.0
  %251 = vmatpush1.msra.mxu0 0.0
  %252 = vmatprep.subr.mxu0 0.0
  %253 = vmatpush1.msra.mxu0 0.0
  %254 = vmatprep.subr.mxu0 0.0
  %255 = vmatpush1.msra.mxu0 0.0
  %256 = vmatprep.subr.mxu0 0.0
  %257 = vmatpush1.msra.mxu0 0.0
  %258 = vmatprep.subr.mxu0 0.0
  %259 = vmatpush1.msra.mxu0 0.0
  %260 = vmatprep.subr.mxu0 0.0
  %261 = vmatpush1.msra.mxu0 0.0
  %262 = vmatprep.subr.mxu0 0.0
  %263 = vmatpush1.msra.mxu0 0.0
  %264 = vmatprep.subr.mxu0 0.0
  %265 = vmatpush1.msra.mxu0 0.0
  %266 = vmatprep.subr.mxu0 0.0
  %267 = vmatpush1.msra.mxu0 0.0
  %268 = vmatprep.subr.mxu0 0.0
  %269 = vmatpush1.msra.mxu0 0.0
  %270 = vmatprep.subr.mxu0 0.0
  %271 = vmatpush1.msra.mxu0 0.0
  %272 = vmatprep.subr.mxu0 0.0
  %273 = vmatpush1.msra.mxu0 %v233
  %274 = vmatprep.subr.mxu0 0.0
  %275 = vmatpush1.msra.mxu0 %v232
  %276 = vmatprep.subr.mxu0 0.0
  %277 = vmatpush1.msra.mxu0 %v231
  %278 = vmatprep.subr.mxu0 0.0
  %279 = vmatpush1.msra.mxu0 %v230
  %280 = vmatprep.subr.mxu0 0.0
  %281 = vmatpush2.msra.mxu0 0.0
  %282 = vmatprep.subr.mxu0 0.0
  %283 = vmatpush2.msra.mxu0 0.0
  %284 = vmatprep.subr.mxu0 0.0
  %285 = vmatpush2.msra.mxu0 0.0
  %286 = vmatprep.subr.mxu0 0.0
  %287 = vmatpush2.msra.mxu0 0.0
  %288 = vmatprep.subr.mxu0 0.0
  %289 = vmatpush2.msra.mxu0 0.0
  %290 = vmatprep.subr.mxu0 0.0
  %291 = vmatpush2.msra.mxu0 0.0
  %292 = vmatprep.subr.mxu0 0.0
  %293 = vmatpush2.msra.mxu0 0.0
  %294 = vmatprep.subr.mxu0 0.0
  %295 = vmatpush2.msra.mxu0 0.0
  %296 = vmatprep.subr.mxu0 0.0
  %297 = vmatpush2.msra.mxu0 0.0
  %298 = vmatprep.subr.mxu0 0.0
  %299 = vmatpush2.msra.mxu0 0.0
  %300 = vmatprep.subr.mxu0 0.0
  %301 = vmatpush2.msra.mxu0 0.0
  %302 = vmatprep.subr.mxu0 0.0
  %303 = vmatpush2.msra.mxu0 0.0
  %304 = vmatprep.subr.mxu0 0.0
  %305 = vmatpush2.msra.mxu0 0.0
  %306 = vmatprep.subr.mxu0 0.0
  %307 = vmatpush2.msra.mxu0 0.0
  %308 = vmatprep.subr.mxu0 0.0
  %309 = vmatpush2.msra.mxu0 0.0
  %310 = vmatprep.subr.mxu0 0.0
  %311 = vmatpush2.msra.mxu0 0.0
  %312 = vmatprep.mubr.f32.mxu0 0.0
  %313 = vmatmul.mubr.f32.gmra.mxu0 %v243
  %v314 = vpop.f32.mrf.mxu0
  %v315 = vadd.f32 %v239, %v314
  %v316 = vpop.f32.mrf.mxu0
  %317 = vmatprep.mubr.f32.mxu0 0.0
  %318 = vmatmul.mubr.f32.gmra.mxu0 %v246
  %v319 = vpop.f32.mrf.mxu0
  %v320 = vadd.f32 %v239, %v319
  %v321 = vpop.f32.mrf.mxu0
  %322 = vdwg.mxu0
  %v323 = vtanh.pop %v315
  %v324 = vtanh.pop %v320
  %v325 = vld [vmem:[%s6] sm:$0xff]
  %v326 = vld [vmem:[%s6 + $0x8] sm:$0xff]
  %v327 = vld [vmem:[%s6 + $0x10] sm:$0xff]
  %v328 = vld [vmem:[%s6 + $0x18] sm:$0xff]
  %v329 = vld [vmem:[%s6 + $0x20] sm:$0xff]
  %v330 = vld [vmem:[%s6 + $0x28] sm:$0xff]
  %v331 = vld [vmem:[%s6 + $0x30] sm:$0xff]
  %v332 = vld [vmem:[%s6 + $0x38] sm:$0xff]
  %v333 = vld [vmem:[%s7] sm:$0x1]
  %v335 = vlaneseq
  %v336 = vshrl.u32 %v335, 7
  %v337 = vsub.s32 0, %v336
  %v338 = vrot.slane %v333, %v337
  %vm340 = vcmask 523264
  %v342 = vsel %vm340, %v323, 0
  %v345 = vsel %vm340, %v324, 0
  %347 = vmatprep.subr.mxu0 0.0
  %348 = vmatpush1.msra.mxu0 0.0
  %349 = vmatprep.subr.mxu0 0.0
  %350 = vmatpush1.msra.mxu0 0.0
  %351 = vmatprep.subr.mxu0 0.0
  %352 = vmatpush1.msra.mxu0 0.0
  %353 = vmatprep.subr.mxu0 0.0
  %354 = vmatpush1.msra.mxu0 0.0
  %355 = vmatprep.subr.mxu0 0.0
  %356 = vmatpush1.msra.mxu0 0.0
  %357 = vmatprep.subr.mxu0 0.0
  %358 = vmatpush1.msra.mxu0 0.0
  %359 = vmatprep.subr.mxu0 0.0
  %360 = vmatpush1.msra.mxu0 0.0
  %361 = vmatprep.subr.mxu0 0.0
  %362 = vmatpush1.msra.mxu0 0.0
  %363 = vmatprep.subr.mxu0 0.0
  %364 = vmatpush1.msra.mxu0 %v332
  %365 = vmatprep.subr.mxu0 0.0
  %366 = vmatpush1.msra.mxu0 %v331
  %367 = vmatprep.subr.mxu0 0.0
  %368 = vmatpush1.msra.mxu0 %v330
  %369 = vmatprep.subr.mxu0 0.0
  %370 = vmatpush1.msra.mxu0 %v329
  %371 = vmatprep.subr.mxu0 0.0
  %372 = vmatpush1.msra.mxu0 %v328
  %373 = vmatprep.subr.mxu0 0.0
  %374 = vmatpush1.msra.mxu0 %v327
  %375 = vmatprep.subr.mxu0 0.0
  %376 = vmatpush1.msra.mxu0 %v326
  %377 = vmatprep.subr.mxu0 0.0
  %378 = vmatpush1.msra.mxu0 %v325
  %379 = vmatprep.subr.mxu0 0.0
  %380 = vmatpush2.msra.mxu0 0.0
  %381 = vmatprep.subr.mxu0 0.0
  %382 = vmatpush2.msra.mxu0 0.0
  %383 = vmatprep.subr.mxu0 0.0
  %384 = vmatpush2.msra.mxu0 0.0
  %385 = vmatprep.subr.mxu0 0.0
  %386 = vmatpush2.msra.mxu0 0.0
  %387 = vmatprep.subr.mxu0 0.0
  %388 = vmatpush2.msra.mxu0 0.0
  %389 = vmatprep.subr.mxu0 0.0
  %390 = vmatpush2.msra.mxu0 0.0
  %391 = vmatprep.subr.mxu0 0.0
  %392 = vmatpush2.msra.mxu0 0.0
  %393 = vmatprep.subr.mxu0 0.0
  %394 = vmatpush2.msra.mxu0 0.0
  %395 = vmatprep.subr.mxu0 0.0
  %396 = vmatpush2.msra.mxu0 0.0
  %397 = vmatprep.subr.mxu0 0.0
  %398 = vmatpush2.msra.mxu0 0.0
  %399 = vmatprep.subr.mxu0 0.0
  %400 = vmatpush2.msra.mxu0 0.0
  %401 = vmatprep.subr.mxu0 0.0
  %402 = vmatpush2.msra.mxu0 0.0
  %403 = vmatprep.subr.mxu0 0.0
  %404 = vmatpush2.msra.mxu0 0.0
  %405 = vmatprep.subr.mxu0 0.0
  %406 = vmatpush2.msra.mxu0 0.0
  %407 = vmatprep.subr.mxu0 0.0
  %408 = vmatpush2.msra.mxu0 0.0
  %409 = vmatprep.subr.mxu0 0.0
  %410 = vmatpush2.msra.mxu0 0.0
  %411 = vmatprep.mubr.f32.mxu0 0.0
  %412 = vmatmul.mubr.f32.gmra.mxu0 %v342
  %v413 = vpop.f32.mrf.mxu0
  %v414 = vadd.f32 %v338, %v413
  %v415 = vpop.f32.mrf.mxu0
  %416 = vmatprep.mubr.f32.mxu0 0.0
  %417 = vmatmul.mubr.f32.gmra.mxu0 %v345
  %v418 = vpop.f32.mrf.mxu0
  %v419 = vadd.f32 %v338, %v418
  %v420 = vpop.f32.mrf.mxu0
  %421 = vdwg.mxu0
  %v422 = vadd.f32 %v228, %v414
  %v423 = vadd.f32 %v229, %v419
  %v424 = vld [vmem:[%s8] sm:$0xff]
  %v425 = vld [vmem:[%s8 + $0x8] sm:$0xff]
  %v426 = vld [vmem:[%s8 + $0x10] sm:$0xff]
  %v427 = vld [vmem:[%s8 + $0x18] sm:$0xff]
  %v428 = vld [vmem:[%s9] sm:$0x1]
  %v430 = vlaneseq
  %v431 = vshrl.u32 %v430, 7
  %v432 = vsub.s32 0, %v431
  %v433 = vrot.slane %v428, %v432
  %v436 = vsel %vm241, %v422, 0
  %v439 = vsel %vm241, %v423, 0
  %441 = vmatprep.subr.mxu0 0.0
  %442 = vmatpush1.msra.mxu0 0.0
  %443 = vmatprep.subr.mxu0 0.0
  %444 = vmatpush1.msra.mxu0 0.0
  %445 = vmatprep.subr.mxu0 0.0
  %446 = vmatpush1.msra.mxu0 0.0
  %447 = vmatprep.subr.mxu0 0.0
  %448 = vmatpush1.msra.mxu0 0.0
  %449 = vmatprep.subr.mxu0 0.0
  %450 = vmatpush1.msra.mxu0 0.0
  %451 = vmatprep.subr.mxu0 0.0
  %452 = vmatpush1.msra.mxu0 0.0
  %453 = vmatprep.subr.mxu0 0.0
  %454 = vmatpush1.msra.mxu0 0.0
  %455 = vmatprep.subr.mxu0 0.0
  %456 = vmatpush1.msra.mxu0 0.0
  %457 = vmatprep.subr.mxu0 0.0
  %458 = vmatpush1.msra.mxu0 0.0
  %459 = vmatprep.subr.mxu0 0.0
  %460 = vmatpush1.msra.mxu0 0.0
  %461 = vmatprep.subr.mxu0 0.0
  %462 = vmatpush1.msra.mxu0 0.0
  %463 = vmatprep.subr.mxu0 0.0
  %464 = vmatpush1.msra.mxu0 0.0
  %465 = vmatprep.subr.mxu0 0.0
  %466 = vmatpush1.msra.mxu0 %v427
  %467 = vmatprep.subr.mxu0 0.0
  %468 = vmatpush1.msra.mxu0 %v426
  %469 = vmatprep.subr.mxu0 0.0
  %470 = vmatpush1.msra.mxu0 %v425
  %471 = vmatprep.subr.mxu0 0.0
  %472 = vmatpush1.msra.mxu0 %v424
  %473 = vmatprep.subr.mxu0 0.0
  %474 = vmatpush2.msra.mxu0 0.0
  %475 = vmatprep.subr.mxu0 0.0
  %476 = vmatpush2.msra.mxu0 0.0
  %477 = vmatprep.subr.mxu0 0.0
  %478 = vmatpush2.msra.mxu0 0.0
  %479 = vmatprep.subr.mxu0 0.0
  %480 = vmatpush2.msra.mxu0 0.0
  %481 = vmatprep.subr.mxu0 0.0
  %482 = vmatpush2.msra.mxu0 0.0
  %483 = vmatprep.subr.mxu0 0.0
  %484 = vmatpush2.msra.mxu0 0.0
  %485 = vmatprep.subr.mxu0 0.0
  %486 = vmatpush2.msra.mxu0 0.0
  %487 = vmatprep.subr.mxu0 0.0
  %488 = vmatpush2.msra.mxu0 0.0
  %489 = vmatprep.subr.mxu0 0.0
  %490 = vmatpush2.msra.mxu0 0.0
  %491 = vmatprep.subr.mxu0 0.0
  %492 = vmatpush2.msra.mxu0 0.0
  %493 = vmatprep.subr.mxu0 0.0
  %494 = vmatpush2.msra.mxu0 0.0
  %495 = vmatprep.subr.mxu0 0.0
  %496 = vmatpush2.msra.mxu0 0.0
  %497 = vmatprep.subr.mxu0 0.0
  %498 = vmatpush2.msra.mxu0 0.0
  %499 = vmatprep.subr.mxu0 0.0
  %500 = vmatpush2.msra.mxu0 0.0
  %501 = vmatprep.subr.mxu0 0.0
  %502 = vmatpush2.msra.mxu0 0.0
  %503 = vmatprep.subr.mxu0 0.0
  %504 = vmatpush2.msra.mxu0 0.0
  %505 = vmatprep.mubr.f32.mxu0 0.0
  %506 = vmatmul.mubr.f32.gmra.mxu0 %v436
  %v507 = vpop.f32.mrf.mxu0
  %v508 = vadd.f32 %v433, %v507
  %v509 = vpop.f32.mrf.mxu0
  %510 = vmatprep.mubr.f32.mxu0 0.0
  %511 = vmatmul.mubr.f32.gmra.mxu0 %v439
  %v512 = vpop.f32.mrf.mxu0
  %v513 = vadd.f32 %v433, %v512
  %v514 = vpop.f32.mrf.mxu0
  %515 = vdwg.mxu0
  %516 = vst [vmem:[%s10] sm:$0xff] %v508
  %517 = vst [vmem:[%s10 + $0x8] sm:$0xff] %v513
  // Predicated region
  $region42: #{bow_forward.1} parent=0 // pred_check
    _
  $region43: #{bow_forward.1} parent=0 // pred_check_branch
    %519 = sbr.rel (0) target = $region45
  $region44: #{bow_forward.1} parent=0 // pred_region
    _
  $region45: #{bow_forward.1} parent=0 // pred_fallthru
    _
  // Predicated region
  $region46: #{bow_forward.1} parent=0 // pred_check
    _
  $region47: #{bow_forward.1} parent=0 // pred_check_branch
    %521 = sbr.rel (0) target = $region49
  $region48: #{bow_forward.1} parent=0 // pred_region
    _
  $region49: #{bow_forward.1} parent=0 // pred_fallthru
    _

</llo_original>
